<compile_context>
chip_gen: v5e
topology: v5e:2x2
jax: 0.10.0
libtpu: 0.0.40
codegen_flags: <defaults>
</compile_context>

<pallas_src>
import jax
import jax.numpy as jnp
from jax.experimental import pallas as pl
from jax.experimental.pallas import tpu as pltpu

# packed-weight layout inside the (46,) SMEM vector
_W1 = 0      # w1[0, j]        -> 0..4
_B1 = 5      # b1[j]           -> 5..9
_W2 = 10     # w2[k, j] = 10+5k+j (row-major, (in, out))
_B2 = 35     # b2[j]           -> 35..39
_W3 = 40     # w3[j, 0]        -> 40..44
_B3 = 45     # b3[0]           -> 45

_LANES = 128


def _sigmoid(x):
    # one EUP transcendental instead of exp + divide
    return 0.5 * (jnp.tanh(0.5 * x) + 1.0)


def _mlp_kernel(wb_ref, x_ref, o_ref):
    # wb_ref: SMEM (46,) f32 packed parameters
    # x_ref / o_ref: VMEM (tm, 128) f32 lane-dense element blocks
    x = x_ref[...]

    # layer 1: h1_j = sigmoid(x * w1_j + b1_j)   (scalar-broadcast FMAs)
    h1 = [_sigmoid(x * wb_ref[_W1 + j] + wb_ref[_B1 + j]) for j in range(5)]

    # layer 2: h2_j = sigmoid(sum_k h1_k * w2[k,j] + b2_j)
    h2 = []
    for j in range(5):
        s = h1[0] * wb_ref[_W2 + 0 * 5 + j]
        for k in range(1, 5):
            s = s + h1[k] * wb_ref[_W2 + k * 5 + j]
        h2.append(_sigmoid(s + wb_ref[_B2 + j]))

    # layer 3 (no activation): out = sum_j h2_j * w3[j] + b3
    out = h2[0] * wb_ref[_W3 + 0]
    for j in range(1, 5):
        out = out + h2[j] * wb_ref[_W3 + j]
    out = out + wb_ref[_B3]

    o_ref[...] = out.astype(o_ref.dtype)


def _pack_params(p):
    return jnp.concatenate([
        p["w1"].reshape(-1).astype(jnp.float32),   # (5,)
        p["b1"].reshape(-1).astype(jnp.float32),   # (5,)
        p["w2"].reshape(-1).astype(jnp.float32),   # (25,)
        p["b2"].reshape(-1).astype(jnp.float32),   # (5,)
        p["w3"].reshape(-1).astype(jnp.float32),   # (5,)
        p["b3"].reshape(-1).astype(jnp.float32),   # (1,)
    ])


def _round_up(a, m):
    return ((a + m - 1) // m) * m


def net_forward(x, params, *, max_block_rows=2048):
    """Pallas implementation of Net.forward.

    x: any-shaped float32 array; semantically flattened to (-1, 1) like
       torch's x.view(-1, 1). Returns (N, 1) float32.
    params: dict with w1 (1,5), b1 (5,), w2 (5,5), b2 (5,), w3 (5,1), b3 (1,)
            (weights stored transposed as (in, out)).
    """
    xf = jnp.ravel(x).astype(jnp.float32)
    n = xf.shape[0]

    # lane-dense layout: (rows, 128); pad rows so the grid has >= 2 steps
    # (keeps both v7x TensorCores busy) and blocks satisfy the (8,128) rule.
    rows = max(16, _round_up(-(-n // _LANES), 16))
    tm = min(max_block_rows, rows // 2)          # multiple of 8 by construction
    rows = _round_up(rows, tm)
    total = rows * _LANES

    xp = jnp.pad(xf, (0, total - n))             # padded zeros never reach output
    x2 = xp.reshape(rows, _LANES)

    wb = _pack_params(params)                    # (46,) f32, lives in SMEM

    out2 = pl.pallas_call(
        _mlp_kernel,
        out_shape=jax.ShapeDtypeStruct((rows, _LANES), jnp.float32),
        grid_spec=pltpu.PrefetchScalarGridSpec(
            num_scalar_prefetch=0,
            grid=(rows // tm,),
            in_specs=[
                # single packed parameter operand, resident in SMEM
                pl.BlockSpec(memory_space=pltpu.MemorySpace.SMEM),
                # lane-dense input block
                pl.BlockSpec((tm, _LANES), lambda i: (i, 0)),
            ],
            # lane-dense output block -> full-width unmasked stores
            out_specs=pl.BlockSpec((tm, _LANES), lambda i: (i, 0)),
        ),
        compiler_params=pltpu.CompilerParams(
            dimension_semantics=("parallel",)),
    )(wb, x2)

    return out2.reshape(-1)[:n].reshape(n, 1)


def init_params(key):
    """Deterministic init mimicking torch.nn.Linear default (U[-1/sqrt(fan_in), +])."""
    k1, k2, k3, k4, k5, k6 = jax.random.split(key, 6)

    def lin(kw, kb, fan_in, fan_out):
        bound = 1.0 / jnp.sqrt(jnp.float32(fan_in))
        w = jax.random.uniform(kw, (fan_in, fan_out), jnp.float32, -bound, bound)
        b = jax.random.uniform(kb, (fan_out,), jnp.float32, -bound, bound)
        return w, b

    w1, b1 = lin(k1, k2, 1, 5)
    w2, b2 = lin(k3, k4, 5, 5)
    w3, b3 = lin(k5, k6, 5, 1)
    return {"w1": w1, "b1": b1, "w2": w2, "b2": b2, "w3": w3, "b3": b3}


def _ref_forward(x, p):
    xf = x.reshape(-1, 1).astype(jnp.float32)
    h1 = jax.nn.sigmoid(xf @ p["w1"] + p["b1"])
    h2 = jax.nn.sigmoid(h1 @ p["w2"] + p["b2"])
    return h2 @ p["w3"] + p["b3"]


if __name__ == "__main__":
    key = jax.random.PRNGKey(0)
    kx, kp = jax.random.split(key)
    # small input; forward flattens to (-1, 1) regardless of original shape
    x = jax.random.normal(kx, (2, 4, 16, 16), jnp.float32)  # -> 2048 elements
    params = init_params(kp)

    out = net_forward(x, params)
    out = jax.block_until_ready(out)

    ref = _ref_forward(x, params)
    assert out.shape == (2 * 4 * 16 * 16, 1)
    assert jnp.allclose(out, ref, atol=1e-5, rtol=1e-5)
    print("KERNEL_OK")
</pallas_src>

<mosaic_0001>
module attributes {stable_mosaic.version = 11 : i64} {
  func.func @_mlp_kernel(%arg0: i32, %arg1: memref<46xf32, #tpu.memory_space<smem>>, %arg2: memref<8x128xf32, #tpu.memory_space<vmem>>, %arg3: memref<8x128xf32, #tpu.memory_space<vmem>>) attributes {dimension_semantics = [#tpu.dimension_semantics<parallel>], iteration_bounds = array<i64: 2>, scalar_prefetch = 0 : i64, scratch_operands = 0 : i64, tpu.core_type = #tpu.core_type<tc>, window_params = [{transform_indices = @transform_0, window_bounds = array<i64: 46>}, {transform_indices = @transform_1, window_bounds = array<i64: 8, 128>}, {transform_indices = @transform_2, window_bounds = array<i64: 8, 128>}]} {
    %c0 = arith.constant 0 : index
    %c0_0 = arith.constant 0 : index
    %0 = vector.load %arg2[%c0, %c0_0] : memref<8x128xf32, #tpu.memory_space<vmem>>, vector<8x128xf32>
    %c0_1 = arith.constant 0 : index
    %1 = memref.load %arg1[%c0_1] : memref<46xf32, #tpu.memory_space<smem>>
    %2 = vector.broadcast %1 : f32 to vector<8x128xf32>
    %3 = arith.mulf %0, %2 : vector<8x128xf32>
    %c5 = arith.constant 5 : index
    %4 = memref.load %arg1[%c5] : memref<46xf32, #tpu.memory_space<smem>>
    %5 = vector.broadcast %4 : f32 to vector<8x128xf32>
    %6 = arith.addf %3, %5 : vector<8x128xf32>
    %cst = arith.constant 5.000000e-01 : f32
    %7 = vector.broadcast %cst : f32 to vector<8x128xf32>
    %8 = arith.mulf %7, %6 : vector<8x128xf32>
    %9 = math.tanh %8 : vector<8x128xf32>
    %cst_2 = arith.constant 1.000000e+00 : f32
    %10 = vector.broadcast %cst_2 : f32 to vector<8x128xf32>
    %11 = arith.addf %9, %10 : vector<8x128xf32>
    %cst_3 = arith.constant 5.000000e-01 : f32
    %12 = vector.broadcast %cst_3 : f32 to vector<8x128xf32>
    %13 = arith.mulf %12, %11 : vector<8x128xf32>
    %c1 = arith.constant 1 : index
    %14 = memref.load %arg1[%c1] : memref<46xf32, #tpu.memory_space<smem>>
    %15 = vector.broadcast %14 : f32 to vector<8x128xf32>
    %16 = arith.mulf %0, %15 : vector<8x128xf32>
    %c6 = arith.constant 6 : index
    %17 = memref.load %arg1[%c6] : memref<46xf32, #tpu.memory_space<smem>>
    %18 = vector.broadcast %17 : f32 to vector<8x128xf32>
    %19 = arith.addf %16, %18 : vector<8x128xf32>
    %cst_4 = arith.constant 5.000000e-01 : f32
    %20 = vector.broadcast %cst_4 : f32 to vector<8x128xf32>
    %21 = arith.mulf %20, %19 : vector<8x128xf32>
    %22 = math.tanh %21 : vector<8x128xf32>
    %cst_5 = arith.constant 1.000000e+00 : f32
    %23 = vector.broadcast %cst_5 : f32 to vector<8x128xf32>
    %24 = arith.addf %22, %23 : vector<8x128xf32>
    %cst_6 = arith.constant 5.000000e-01 : f32
    %25 = vector.broadcast %cst_6 : f32 to vector<8x128xf32>
    %26 = arith.mulf %25, %24 : vector<8x128xf32>
    %c2 = arith.constant 2 : index
    %27 = memref.load %arg1[%c2] : memref<46xf32, #tpu.memory_space<smem>>
    %28 = vector.broadcast %27 : f32 to vector<8x128xf32>
    %29 = arith.mulf %0, %28 : vector<8x128xf32>
    %c7 = arith.constant 7 : index
    %30 = memref.load %arg1[%c7] : memref<46xf32, #tpu.memory_space<smem>>
    %31 = vector.broadcast %30 : f32 to vector<8x128xf32>
    %32 = arith.addf %29, %31 : vector<8x128xf32>
    %cst_7 = arith.constant 5.000000e-01 : f32
    %33 = vector.broadcast %cst_7 : f32 to vector<8x128xf32>
    %34 = arith.mulf %33, %32 : vector<8x128xf32>
    %35 = math.tanh %34 : vector<8x128xf32>
    %cst_8 = arith.constant 1.000000e+00 : f32
    %36 = vector.broadcast %cst_8 : f32 to vector<8x128xf32>
    %37 = arith.addf %35, %36 : vector<8x128xf32>
    %cst_9 = arith.constant 5.000000e-01 : f32
    %38 = vector.broadcast %cst_9 : f32 to vector<8x128xf32>
    %39 = arith.mulf %38, %37 : vector<8x128xf32>
    %c3 = arith.constant 3 : index
    %40 = memref.load %arg1[%c3] : memref<46xf32, #tpu.memory_space<smem>>
    %41 = vector.broadcast %40 : f32 to vector<8x128xf32>
    %42 = arith.mulf %0, %41 : vector<8x128xf32>
    %c8 = arith.constant 8 : index
    %43 = memref.load %arg1[%c8] : memref<46xf32, #tpu.memory_space<smem>>
    %44 = vector.broadcast %43 : f32 to vector<8x128xf32>
    %45 = arith.addf %42, %44 : vector<8x128xf32>
    %cst_10 = arith.constant 5.000000e-01 : f32
    %46 = vector.broadcast %cst_10 : f32 to vector<8x128xf32>
    %47 = arith.mulf %46, %45 : vector<8x128xf32>
    %48 = math.tanh %47 : vector<8x128xf32>
    %cst_11 = arith.constant 1.000000e+00 : f32
    %49 = vector.broadcast %cst_11 : f32 to vector<8x128xf32>
    %50 = arith.addf %48, %49 : vector<8x128xf32>
    %cst_12 = arith.constant 5.000000e-01 : f32
    %51 = vector.broadcast %cst_12 : f32 to vector<8x128xf32>
    %52 = arith.mulf %51, %50 : vector<8x128xf32>
    %c4 = arith.constant 4 : index
    %53 = memref.load %arg1[%c4] : memref<46xf32, #tpu.memory_space<smem>>
    %54 = vector.broadcast %53 : f32 to vector<8x128xf32>
    %55 = arith.mulf %0, %54 : vector<8x128xf32>
    %c9 = arith.constant 9 : index
    %56 = memref.load %arg1[%c9] : memref<46xf32, #tpu.memory_space<smem>>
    %57 = vector.broadcast %56 : f32 to vector<8x128xf32>
    %58 = arith.addf %55, %57 : vector<8x128xf32>
    %cst_13 = arith.constant 5.000000e-01 : f32
    %59 = vector.broadcast %cst_13 : f32 to vector<8x128xf32>
    %60 = arith.mulf %59, %58 : vector<8x128xf32>
    %61 = math.tanh %60 : vector<8x128xf32>
    %cst_14 = arith.constant 1.000000e+00 : f32
    %62 = vector.broadcast %cst_14 : f32 to vector<8x128xf32>
    %63 = arith.addf %61, %62 : vector<8x128xf32>
    %cst_15 = arith.constant 5.000000e-01 : f32
    %64 = vector.broadcast %cst_15 : f32 to vector<8x128xf32>
    %65 = arith.mulf %64, %63 : vector<8x128xf32>
    %c10 = arith.constant 10 : index
    %66 = memref.load %arg1[%c10] : memref<46xf32, #tpu.memory_space<smem>>
    %67 = vector.broadcast %66 : f32 to vector<8x128xf32>
    %68 = arith.mulf %13, %67 : vector<8x128xf32>
    %c15 = arith.constant 15 : index
    %69 = memref.load %arg1[%c15] : memref<46xf32, #tpu.memory_space<smem>>
    %70 = vector.broadcast %69 : f32 to vector<8x128xf32>
    %71 = arith.mulf %26, %70 : vector<8x128xf32>
    %72 = arith.addf %68, %71 : vector<8x128xf32>
    %c20 = arith.constant 20 : index
    %73 = memref.load %arg1[%c20] : memref<46xf32, #tpu.memory_space<smem>>
    %74 = vector.broadcast %73 : f32 to vector<8x128xf32>
    %75 = arith.mulf %39, %74 : vector<8x128xf32>
    %76 = arith.addf %72, %75 : vector<8x128xf32>
    %c25 = arith.constant 25 : index
    %77 = memref.load %arg1[%c25] : memref<46xf32, #tpu.memory_space<smem>>
    %78 = vector.broadcast %77 : f32 to vector<8x128xf32>
    %79 = arith.mulf %52, %78 : vector<8x128xf32>
    %80 = arith.addf %76, %79 : vector<8x128xf32>
    %c30 = arith.constant 30 : index
    %81 = memref.load %arg1[%c30] : memref<46xf32, #tpu.memory_space<smem>>
    %82 = vector.broadcast %81 : f32 to vector<8x128xf32>
    %83 = arith.mulf %65, %82 : vector<8x128xf32>
    %84 = arith.addf %80, %83 : vector<8x128xf32>
    %c35 = arith.constant 35 : index
    %85 = memref.load %arg1[%c35] : memref<46xf32, #tpu.memory_space<smem>>
    %86 = vector.broadcast %85 : f32 to vector<8x128xf32>
    %87 = arith.addf %84, %86 : vector<8x128xf32>
    %cst_16 = arith.constant 5.000000e-01 : f32
    %88 = vector.broadcast %cst_16 : f32 to vector<8x128xf32>
    %89 = arith.mulf %88, %87 : vector<8x128xf32>
    %90 = math.tanh %89 : vector<8x128xf32>
    %cst_17 = arith.constant 1.000000e+00 : f32
    %91 = vector.broadcast %cst_17 : f32 to vector<8x128xf32>
    %92 = arith.addf %90, %91 : vector<8x128xf32>
    %cst_18 = arith.constant 5.000000e-01 : f32
    %93 = vector.broadcast %cst_18 : f32 to vector<8x128xf32>
    %94 = arith.mulf %93, %92 : vector<8x128xf32>
    %c11 = arith.constant 11 : index
    %95 = memref.load %arg1[%c11] : memref<46xf32, #tpu.memory_space<smem>>
    %96 = vector.broadcast %95 : f32 to vector<8x128xf32>
    %97 = arith.mulf %13, %96 : vector<8x128xf32>
    %c16 = arith.constant 16 : index
    %98 = memref.load %arg1[%c16] : memref<46xf32, #tpu.memory_space<smem>>
    %99 = vector.broadcast %98 : f32 to vector<8x128xf32>
    %100 = arith.mulf %26, %99 : vector<8x128xf32>
    %101 = arith.addf %97, %100 : vector<8x128xf32>
    %c21 = arith.constant 21 : index
    %102 = memref.load %arg1[%c21] : memref<46xf32, #tpu.memory_space<smem>>
    %103 = vector.broadcast %102 : f32 to vector<8x128xf32>
    %104 = arith.mulf %39, %103 : vector<8x128xf32>
    %105 = arith.addf %101, %104 : vector<8x128xf32>
    %c26 = arith.constant 26 : index
    %106 = memref.load %arg1[%c26] : memref<46xf32, #tpu.memory_space<smem>>
    %107 = vector.broadcast %106 : f32 to vector<8x128xf32>
    %108 = arith.mulf %52, %107 : vector<8x128xf32>
    %109 = arith.addf %105, %108 : vector<8x128xf32>
    %c31 = arith.constant 31 : index
    %110 = memref.load %arg1[%c31] : memref<46xf32, #tpu.memory_space<smem>>
    %111 = vector.broadcast %110 : f32 to vector<8x128xf32>
    %112 = arith.mulf %65, %111 : vector<8x128xf32>
    %113 = arith.addf %109, %112 : vector<8x128xf32>
    %c36 = arith.constant 36 : index
    %114 = memref.load %arg1[%c36] : memref<46xf32, #tpu.memory_space<smem>>
    %115 = vector.broadcast %114 : f32 to vector<8x128xf32>
    %116 = arith.addf %113, %115 : vector<8x128xf32>
    %cst_19 = arith.constant 5.000000e-01 : f32
    %117 = vector.broadcast %cst_19 : f32 to vector<8x128xf32>
    %118 = arith.mulf %117, %116 : vector<8x128xf32>
    %119 = math.tanh %118 : vector<8x128xf32>
    %cst_20 = arith.constant 1.000000e+00 : f32
    %120 = vector.broadcast %cst_20 : f32 to vector<8x128xf32>
    %121 = arith.addf %119, %120 : vector<8x128xf32>
    %cst_21 = arith.constant 5.000000e-01 : f32
    %122 = vector.broadcast %cst_21 : f32 to vector<8x128xf32>
    %123 = arith.mulf %122, %121 : vector<8x128xf32>
    %c12 = arith.constant 12 : index
    %124 = memref.load %arg1[%c12] : memref<46xf32, #tpu.memory_space<smem>>
    %125 = vector.broadcast %124 : f32 to vector<8x128xf32>
    %126 = arith.mulf %13, %125 : vector<8x128xf32>
    %c17 = arith.constant 17 : index
    %127 = memref.load %arg1[%c17] : memref<46xf32, #tpu.memory_space<smem>>
    %128 = vector.broadcast %127 : f32 to vector<8x128xf32>
    %129 = arith.mulf %26, %128 : vector<8x128xf32>
    %130 = arith.addf %126, %129 : vector<8x128xf32>
    %c22 = arith.constant 22 : index
    %131 = memref.load %arg1[%c22] : memref<46xf32, #tpu.memory_space<smem>>
    %132 = vector.broadcast %131 : f32 to vector<8x128xf32>
    %133 = arith.mulf %39, %132 : vector<8x128xf32>
    %134 = arith.addf %130, %133 : vector<8x128xf32>
    %c27 = arith.constant 27 : index
    %135 = memref.load %arg1[%c27] : memref<46xf32, #tpu.memory_space<smem>>
    %136 = vector.broadcast %135 : f32 to vector<8x128xf32>
    %137 = arith.mulf %52, %136 : vector<8x128xf32>
    %138 = arith.addf %134, %137 : vector<8x128xf32>
    %c32 = arith.constant 32 : index
    %139 = memref.load %arg1[%c32] : memref<46xf32, #tpu.memory_space<smem>>
    %140 = vector.broadcast %139 : f32 to vector<8x128xf32>
    %141 = arith.mulf %65, %140 : vector<8x128xf32>
    %142 = arith.addf %138, %141 : vector<8x128xf32>
    %c37 = arith.constant 37 : index
    %143 = memref.load %arg1[%c37] : memref<46xf32, #tpu.memory_space<smem>>
    %144 = vector.broadcast %143 : f32 to vector<8x128xf32>
    %145 = arith.addf %142, %144 : vector<8x128xf32>
    %cst_22 = arith.constant 5.000000e-01 : f32
    %146 = vector.broadcast %cst_22 : f32 to vector<8x128xf32>
    %147 = arith.mulf %146, %145 : vector<8x128xf32>
    %148 = math.tanh %147 : vector<8x128xf32>
    %cst_23 = arith.constant 1.000000e+00 : f32
    %149 = vector.broadcast %cst_23 : f32 to vector<8x128xf32>
    %150 = arith.addf %148, %149 : vector<8x128xf32>
    %cst_24 = arith.constant 5.000000e-01 : f32
    %151 = vector.broadcast %cst_24 : f32 to vector<8x128xf32>
    %152 = arith.mulf %151, %150 : vector<8x128xf32>
    %c13 = arith.constant 13 : index
    %153 = memref.load %arg1[%c13] : memref<46xf32, #tpu.memory_space<smem>>
    %154 = vector.broadcast %153 : f32 to vector<8x128xf32>
    %155 = arith.mulf %13, %154 : vector<8x128xf32>
    %c18 = arith.constant 18 : index
    %156 = memref.load %arg1[%c18] : memref<46xf32, #tpu.memory_space<smem>>
    %157 = vector.broadcast %156 : f32 to vector<8x128xf32>
    %158 = arith.mulf %26, %157 : vector<8x128xf32>
    %159 = arith.addf %155, %158 : vector<8x128xf32>
    %c23 = arith.constant 23 : index
    %160 = memref.load %arg1[%c23] : memref<46xf32, #tpu.memory_space<smem>>
    %161 = vector.broadcast %160 : f32 to vector<8x128xf32>
    %162 = arith.mulf %39, %161 : vector<8x128xf32>
    %163 = arith.addf %159, %162 : vector<8x128xf32>
    %c28 = arith.constant 28 : index
    %164 = memref.load %arg1[%c28] : memref<46xf32, #tpu.memory_space<smem>>
    %165 = vector.broadcast %164 : f32 to vector<8x128xf32>
    %166 = arith.mulf %52, %165 : vector<8x128xf32>
    %167 = arith.addf %163, %166 : vector<8x128xf32>
    %c33 = arith.constant 33 : index
    %168 = memref.load %arg1[%c33] : memref<46xf32, #tpu.memory_space<smem>>
    %169 = vector.broadcast %168 : f32 to vector<8x128xf32>
    %170 = arith.mulf %65, %169 : vector<8x128xf32>
    %171 = arith.addf %167, %170 : vector<8x128xf32>
    %c38 = arith.constant 38 : index
    %172 = memref.load %arg1[%c38] : memref<46xf32, #tpu.memory_space<smem>>
    %173 = vector.broadcast %172 : f32 to vector<8x128xf32>
    %174 = arith.addf %171, %173 : vector<8x128xf32>
    %cst_25 = arith.constant 5.000000e-01 : f32
    %175 = vector.broadcast %cst_25 : f32 to vector<8x128xf32>
    %176 = arith.mulf %175, %174 : vector<8x128xf32>
    %177 = math.tanh %176 : vector<8x128xf32>
    %cst_26 = arith.constant 1.000000e+00 : f32
    %178 = vector.broadcast %cst_26 : f32 to vector<8x128xf32>
    %179 = arith.addf %177, %178 : vector<8x128xf32>
    %cst_27 = arith.constant 5.000000e-01 : f32
    %180 = vector.broadcast %cst_27 : f32 to vector<8x128xf32>
    %181 = arith.mulf %180, %179 : vector<8x128xf32>
    %c14 = arith.constant 14 : index
    %182 = memref.load %arg1[%c14] : memref<46xf32, #tpu.memory_space<smem>>
    %183 = vector.broadcast %182 : f32 to vector<8x128xf32>
    %184 = arith.mulf %13, %183 : vector<8x128xf32>
    %c19 = arith.constant 19 : index
    %185 = memref.load %arg1[%c19] : memref<46xf32, #tpu.memory_space<smem>>
    %186 = vector.broadcast %185 : f32 to vector<8x128xf32>
    %187 = arith.mulf %26, %186 : vector<8x128xf32>
    %188 = arith.addf %184, %187 : vector<8x128xf32>
    %c24 = arith.constant 24 : index
    %189 = memref.load %arg1[%c24] : memref<46xf32, #tpu.memory_space<smem>>
    %190 = vector.broadcast %189 : f32 to vector<8x128xf32>
    %191 = arith.mulf %39, %190 : vector<8x128xf32>
    %192 = arith.addf %188, %191 : vector<8x128xf32>
    %c29 = arith.constant 29 : index
    %193 = memref.load %arg1[%c29] : memref<46xf32, #tpu.memory_space<smem>>
    %194 = vector.broadcast %193 : f32 to vector<8x128xf32>
    %195 = arith.mulf %52, %194 : vector<8x128xf32>
    %196 = arith.addf %192, %195 : vector<8x128xf32>
    %c34 = arith.constant 34 : index
    %197 = memref.load %arg1[%c34] : memref<46xf32, #tpu.memory_space<smem>>
    %198 = vector.broadcast %197 : f32 to vector<8x128xf32>
    %199 = arith.mulf %65, %198 : vector<8x128xf32>
    %200 = arith.addf %196, %199 : vector<8x128xf32>
    %c39 = arith.constant 39 : index
    %201 = memref.load %arg1[%c39] : memref<46xf32, #tpu.memory_space<smem>>
    %202 = vector.broadcast %201 : f32 to vector<8x128xf32>
    %203 = arith.addf %200, %202 : vector<8x128xf32>
    %cst_28 = arith.constant 5.000000e-01 : f32
    %204 = vector.broadcast %cst_28 : f32 to vector<8x128xf32>
    %205 = arith.mulf %204, %203 : vector<8x128xf32>
    %206 = math.tanh %205 : vector<8x128xf32>
    %cst_29 = arith.constant 1.000000e+00 : f32
    %207 = vector.broadcast %cst_29 : f32 to vector<8x128xf32>
    %208 = arith.addf %206, %207 : vector<8x128xf32>
    %cst_30 = arith.constant 5.000000e-01 : f32
    %209 = vector.broadcast %cst_30 : f32 to vector<8x128xf32>
    %210 = arith.mulf %209, %208 : vector<8x128xf32>
    %c40 = arith.constant 40 : index
    %211 = memref.load %arg1[%c40] : memref<46xf32, #tpu.memory_space<smem>>
    %212 = vector.broadcast %211 : f32 to vector<8x128xf32>
    %213 = arith.mulf %94, %212 : vector<8x128xf32>
    %c41 = arith.constant 41 : index
    %214 = memref.load %arg1[%c41] : memref<46xf32, #tpu.memory_space<smem>>
    %215 = vector.broadcast %214 : f32 to vector<8x128xf32>
    %216 = arith.mulf %123, %215 : vector<8x128xf32>
    %217 = arith.addf %213, %216 : vector<8x128xf32>
    %c42 = arith.constant 42 : index
    %218 = memref.load %arg1[%c42] : memref<46xf32, #tpu.memory_space<smem>>
    %219 = vector.broadcast %218 : f32 to vector<8x128xf32>
    %220 = arith.mulf %152, %219 : vector<8x128xf32>
    %221 = arith.addf %217, %220 : vector<8x128xf32>
    %c43 = arith.constant 43 : index
    %222 = memref.load %arg1[%c43] : memref<46xf32, #tpu.memory_space<smem>>
    %223 = vector.broadcast %222 : f32 to vector<8x128xf32>
    %224 = arith.mulf %181, %223 : vector<8x128xf32>
    %225 = arith.addf %221, %224 : vector<8x128xf32>
    %c44 = arith.constant 44 : index
    %226 = memref.load %arg1[%c44] : memref<46xf32, #tpu.memory_space<smem>>
    %227 = vector.broadcast %226 : f32 to vector<8x128xf32>
    %228 = arith.mulf %210, %227 : vector<8x128xf32>
    %229 = arith.addf %225, %228 : vector<8x128xf32>
    %c45 = arith.constant 45 : index
    %230 = memref.load %arg1[%c45] : memref<46xf32, #tpu.memory_space<smem>>
    %231 = vector.broadcast %230 : f32 to vector<8x128xf32>
    %232 = arith.addf %229, %231 : vector<8x128xf32>
    %c0_31 = arith.constant 0 : index
    %c0_32 = arith.constant 0 : index
    %233 = vector.load %arg3[%c0_31, %c0_32] : memref<8x128xf32, #tpu.memory_space<vmem>>, vector<8x128xf32>
    tpu.vector_store %arg3[%c0_31, %c0_32], %232 {strides = array<i32>} : memref<8x128xf32, #tpu.memory_space<vmem>>, vector<8x128xf32>,
    return
  }
  func.func @transform_0(%arg0: i32) -> i32 {
    %c0_i32 = arith.constant 0 : i32
    %c0_i32_0 = arith.constant 0 : i32
    return %c0_i32 : i32
  }
  func.func @transform_1(%arg0: i32) -> (i32, i32) {
    %c0_i32 = arith.constant 0 : i32
    %c0_i32_0 = arith.constant 0 : i32
    return %arg0, %c0_i32 : i32, i32
  }
  func.func @transform_2(%arg0: i32) -> (i32, i32) {
    %c0_i32 = arith.constant 0 : i32
    %c0_i32_0 = arith.constant 0 : i32
    return %arg0, %c0_i32 : i32, i32
  }
}

</mosaic_0001>

<llo_original>
// kernel: tpu_custom_call.1
$region0: #{tpu_custom_call.1}
  #allocation0 [shape = 'u32[]', space=smem, size = 0x4, offset = 0x4, fixed_abs, tag = 'smem constant byte address 0x4 - core index']
  #allocation1 [shape = 'u32[72,128]{1,0:T(1,128)}', space=vmem, size = 0x9000, scoped, tag = 'internal scratch']
  %s0 = inlined_call_operand.hbm [shape: f32[46], index: 0, kind: input, shape index: {}]
  %s1 = inlined_call_operand.hbm [shape: f32[16,128], index: 1, kind: input, shape index: {}]
  %s2 = inlined_call_operand.hbm [shape: f32[16,128], index: 2, kind: output, shape index: {}]
  %s3 = sld [smem:[#allocation0]]
  $region49: #{tpu_custom_call.1} parent=0
    _
  %s5 = ssub.s32 1, %s3
  %s6 = scalar_select 0, %s5, %s3
  $region1: #{tpu_custom_call.1} parent=0
    #allocation2 [shape = 'u8[512]{0}', space=smem, size = 0x200, scoped, tag = 'input window, operand 0, single buffered']
    #allocation3 [shape = 's32[2]{0}', space=sflag, size = 0x8, scoped, tag = 'scoped memory for tpu_custom_call.1']
    #allocation4 [shape = 's32[2]{0}', space=sflag, size = 0x8, scoped, tag = 'scoped memory for tpu_custom_call.1']
    #allocation5 [shape = 's32[2]{0}', space=sflag, size = 0x8, scoped, tag = 'scoped memory for tpu_custom_call.1']
    #allocation6 [shape = 'u8[8192]{0}', space=vmem, size = 0x2000, scoped, tag = 'input window, operand 1']
    #allocation7 [shape = 'u8[8192]{0}', space=vmem, size = 0x2000, scoped, tag = 'output window, operand 0']
    %7 = vsyncpa [#allocation5], 0
    %8 = vsyncpa [#allocation3], 0
    %s9 = scalar_lea.sflag [#allocation3], 1
    %10 = vsyncpa %s9, 0
    %11 = vsyncpa [#allocation4], 0
    %s12 = scalar_lea.sflag [#allocation4], 1
    %13 = vsyncpa %s12, 0
    loop: start=0, step=1, limit=4
    $region2: #{tpu_custom_call.1} parent=1 // loop_pre_header
      _
    $region3: #{tpu_custom_call.1} parent=1 // loop_header
      %s15 = sphi 0, %s19
      %p16 = scmp.ge.s32.totalorder %s15, 4
      %s23 = sphi 0, %s23
      %s25 = sphi 0, %s23
      %s26 = sphi 0, %s25
      %s40 = sphi 0, %s26
      %s46 = sphi 0, %s48
      %s49 = sphi 0, %s46
      %s50 = sphi 0, %s49
      %s66 = sphi 0, %s50
      %s72 = sphi 0, %s74
      %s75 = sphi 0, %s72
      %s76 = sphi 0, %s75
      %s92 = sphi 0, %s76
    $region4: #{tpu_custom_call.1} parent=1 // loop_header_branch
      %18 = sbr.rel (%p16) target = $region8
    $region5: #{tpu_custom_call.1} parent=1 // loop_body
      %s20 = ssub.s32 %s15, 1
      %s21 = ssub.s32 %s15, 2
      %s22 = sadd.s32 %s15, 1
      %s24 = sadd.s32 %s23, 1
      %p27 = scmp.eq.s32.totalorder %s15, 1
      %p28 = scmp.ne.s32.totalorder %s23, %s25
      %p29 = scmp.eq.s32.totalorder %s15, 0
      %p30 = por %p28, %p29
      %p31 = scmp.ne.s32.totalorder %s23, %s25
      %p32 = scmp.eq.s32.totalorder %s20, 1
      %p33 = por %p31, %p32
      %p34 = scmp.ne.s32.totalorder %s25, %s26
      %p35 = scmp.eq.s32.totalorder %s20, 0
      %p36 = por %p34, %p35
      %p37 = scmp.ne.s32.totalorder %s25, %s26
      %p38 = scmp.eq.s32.totalorder %s21, 1
      %p39 = por %p37, %p38
      %p41 = scmp.ne.s32.totalorder %s26, %s40
      %p42 = scmp.eq.s32.totalorder %s21, 0
      %p43 = por %p41, %p42
      %s44 = ssub.s32 %s15, %s22
      %p45 = scmp.eq.s32.totalorder %s44, 0
      %s47 = sadd.s32 %s46, 1
      %s48 = scalar_select %p45, %s46, %s47
      %p51 = pneg %p45
      %p52 = scmp.eq.s32.totalorder %s15, 1
      %p53 = por %p51, %p52
      %p54 = scmp.ne.s32.totalorder %s46, %s49
      %p55 = scmp.eq.s32.totalorder %s15, 0
      %p56 = por %p54, %p55
      %p57 = scmp.ne.s32.totalorder %s46, %s49
      %p58 = scmp.eq.s32.totalorder %s20, 1
      %p59 = por %p57, %p58
      %p60 = scmp.ne.s32.totalorder %s49, %s50
      %p61 = scmp.eq.s32.totalorder %s20, 0
      %p62 = por %p60, %p61
      %p63 = scmp.ne.s32.totalorder %s49, %s50
      %p64 = scmp.eq.s32.totalorder %s21, 1
      %p65 = por %p63, %p64
      %p67 = scmp.ne.s32.totalorder %s50, %s66
      %p68 = scmp.eq.s32.totalorder %s21, 0
      %p69 = por %p67, %p68
      %s70 = ssub.s32 %s15, %s22
      %p71 = scmp.eq.s32.totalorder %s70, 0
      %s73 = sadd.s32 %s72, 1
      %s74 = scalar_select %p71, %s72, %s73
      %p77 = pneg %p71
      %p78 = scmp.eq.s32.totalorder %s15, 1
      %p79 = por %p77, %p78
      %p80 = scmp.ne.s32.totalorder %s72, %s75
      %p81 = scmp.eq.s32.totalorder %s15, 0
      %p82 = por %p80, %p81
      %p83 = scmp.ne.s32.totalorder %s72, %s75
      %p84 = scmp.eq.s32.totalorder %s20, 1
      %p85 = por %p83, %p84
      %p86 = scmp.ne.s32.totalorder %s75, %s76
      %p87 = scmp.eq.s32.totalorder %s20, 0
      %p88 = por %p86, %p87
      %p89 = scmp.ne.s32.totalorder %s75, %s76
      %p90 = scmp.eq.s32.totalorder %s21, 1
      %p91 = por %p89, %p90
      %p93 = scmp.ne.s32.totalorder %s76, %s92
      %p94 = scmp.eq.s32.totalorder %s21, 0
      %p95 = por %p93, %p94
      %p96 = scmp.le.s32.totalorder 1, %s15
      %p97 = scmp.lt.s32.totalorder %s15, 3
      %p98 = pnand %p96, %p97
      %p99 = pneg %p98
      // Predicated region
      $region9: #{tpu_custom_call.1} parent=5 // pred_check
        _
      $region10: #{tpu_custom_call.1} parent=5 // pred_check_branch
        %101 = sbr.rel (%p98) target = $region12
      $region11: #{tpu_custom_call.1} parent=5 // pred_region
        %s102 = ssub.s32 %s15, 1
        // Predicated region
        $region13: #{tpu_custom_call.1} parent=11 // pred_check
          %p103 = pneg %p36
        $region14: #{tpu_custom_call.1} parent=11 // pred_check_branch
          %105 = sbr.rel (%p103) target = $region16
        $region15: #{tpu_custom_call.1} parent=11 // pred_region
          %107 = vsyncadd [#allocation5], 0
          %s109 = sshll.u32 %s0, 4
          %s110 = int_to_ptr.hbm [resolvable:$true] %s109
          %112 = dma.hbm_to_smem %s110, 16, [#allocation2], [#allocation5]
        $region16: #{tpu_custom_call.1} parent=11 // pred_fallthru
          _
      $region12: #{tpu_custom_call.1} parent=5 // pred_fallthru
        _
      %p113 = scmp.lt.s32.totalorder %s15, 2
      // Predicated region
      $region17: #{tpu_custom_call.1} parent=5 // pred_check
        %p114 = pneg %p113
      $region18: #{tpu_custom_call.1} parent=5 // pred_check_branch
        %116 = sbr.rel (%p114) target = $region20
      $region19: #{tpu_custom_call.1} parent=5 // pred_region
        // Predicated region
        $region21: #{tpu_custom_call.1} parent=19 // pred_check
          %p117 = pneg %p56
        $region22: #{tpu_custom_call.1} parent=19 // pred_check_branch
          %119 = sbr.rel (%p117) target = $region24
        $region23: #{tpu_custom_call.1} parent=19 // pred_region
          %s120 = sand.u32 %s46, 1
          %s121 = scalar_lea.sflag [#allocation3], %s120
          %s122 = sand.u32 %s46, 1
          %s123 = smul.addr %s122, 8
          %s124 = scalar_lea.vmem [#allocation6], %s123
          %126 = vsyncadd %s121, 0
          %s127 = smul.addr %s15, 8
          %s128 = scalar_lea.hbm %s1, %s127
          %s130 = sshll.u32 %s128, 4
          %s131 = int_to_ptr.hbm [resolvable:$true] %s130
          %s132 = sshll.u32 %s124, 4
          %s133 = int_to_ptr.vmem [resolvable:$true] %s132
          %135 = dma.hbm_to_vmem [thread:$0]  %s131, 128, %s133, %s121
        $region24: #{tpu_custom_call.1} parent=19 // pred_fallthru
          _
      $region20: #{tpu_custom_call.1} parent=5 // pred_fallthru
        _
      %p136 = scmp.le.s32.totalorder 1, %s15
      %p137 = scmp.lt.s32.totalorder %s15, 3
      %p138 = pnand %p136, %p137
      %p139 = pneg %p138
      // Predicated region
      $region25: #{tpu_custom_call.1} parent=5 // pred_check
        _
      $region26: #{tpu_custom_call.1} parent=5 // pred_check_branch
        %141 = sbr.rel (%p138) target = $region28
      $region27: #{tpu_custom_call.1} parent=5 // pred_region
        %s142 = ssub.s32 %s15, 1
        // Predicated region
        $region29: #{tpu_custom_call.1} parent=27 // pred_check
          %p143 = pneg %p36
        $region30: #{tpu_custom_call.1} parent=27 // pred_check_branch
          %145 = sbr.rel (%p143) target = $region32
        $region31: #{tpu_custom_call.1} parent=27 // pred_region
          %147 = dma.done [#allocation5], 16
        $region32: #{tpu_custom_call.1} parent=27 // pred_fallthru
          _
        %s148 = sand.u32 %s49, 1
        %s149 = scalar_lea.sflag [#allocation3], %s148
        %s150 = sand.u32 %s49, 1
        %s151 = smul.addr %s150, 8
        %s152 = scalar_lea.vmem [#allocation6], %s151
        // Predicated region
        $region33: #{tpu_custom_call.1} parent=27 // pred_check
          %p153 = pneg %p62
        $region34: #{tpu_custom_call.1} parent=27 // pred_check_branch
          %155 = sbr.rel (%p153) target = $region36
        $region35: #{tpu_custom_call.1} parent=27 // pred_region
          %157 = dma.done %s149, 128
        $region36: #{tpu_custom_call.1} parent=27 // pred_fallthru
          _
        %158 = sfence
        %p159 = pneg %p36
        %p160 = pneg %p33
        %s161 = sand.u32 %s49, 1
        %s162 = scalar_lea.sflag [#allocation3], %s161
        %s163 = sand.u32 %s49, 1
        %s164 = smul.addr %s163, 8
        %s165 = scalar_lea.vmem [#allocation6], %s164
        %p166 = pneg %p62
        %p167 = pneg %p59
        %p168 = pneg %p88
        %p169 = pneg %p85
        %s170 = sand.u32 %s75, 1
        %s171 = scalar_lea.sflag [#allocation4], %s170
        %s172 = sand.u32 %s75, 1
        %s173 = smul.addr %s172, 8
        %s174 = scalar_lea.vmem [#allocation7], %s173
        %v175 = vld [vmem:[%s152] sm:$0xff]
        %s176 = sld [smem:[#allocation2]]
        %v177 = vstv %s176
        %v178 = vmul.f32 %v175, %v177
        %s179 = sld [smem:[#allocation2 + $0x5]]
        %v180 = vstv %s179
        %v181 = vadd.f32 %v178, %v180
        %v182 = vmul.f32 %v181, 0.5
        %v183 = vtanh.pop %v182
        %v184 = vadd.f32 %v183, 1.0
        %v185 = vmul.f32 %v184, 0.5
        %s186 = sld [smem:[#allocation2 + $0x1]]
        %v187 = vstv %s186
        %v188 = vmul.f32 %v175, %v187
        %s189 = sld [smem:[#allocation2 + $0x6]]
        %v190 = vstv %s189
        %v191 = vadd.f32 %v188, %v190
        %v192 = vmul.f32 %v191, 0.5
        %v193 = vtanh.pop %v192
        %v194 = vadd.f32 %v193, 1.0
        %v195 = vmul.f32 %v194, 0.5
        %s196 = sld [smem:[#allocation2 + $0x2]]
        %v197 = vstv %s196
        %v198 = vmul.f32 %v175, %v197
        %s199 = sld [smem:[#allocation2 + $0x7]]
        %v200 = vstv %s199
        %v201 = vadd.f32 %v198, %v200
        %v202 = vmul.f32 %v201, 0.5
        %v203 = vtanh.pop %v202
        %v204 = vadd.f32 %v203, 1.0
        %v205 = vmul.f32 %v204, 0.5
        %s206 = sld [smem:[#allocation2 + $0x3]]
        %v207 = vstv %s206
        %v208 = vmul.f32 %v175, %v207
        %s209 = sld [smem:[#allocation2 + $0x8]]
        %v210 = vstv %s209
        %v211 = vadd.f32 %v208, %v210
        %v212 = vmul.f32 %v211, 0.5
        %v213 = vtanh.pop %v212
        %v214 = vadd.f32 %v213, 1.0
        %v215 = vmul.f32 %v214, 0.5
        %s216 = sld [smem:[#allocation2 + $0x4]]
        %v217 = vstv %s216
        %v218 = vmul.f32 %v175, %v217
        %s219 = sld [smem:[#allocation2 + $0x9]]
        %v220 = vstv %s219
        %v221 = vadd.f32 %v218, %v220
        %v222 = vmul.f32 %v221, 0.5
        %v223 = vtanh.pop %v222
        %v224 = vadd.f32 %v223, 1.0
        %v225 = vmul.f32 %v224, 0.5
        %s226 = sld [smem:[#allocation2 + $0xa]]
        %v227 = vstv %s226
        %v228 = vmul.f32 %v185, %v227
        %s229 = sld [smem:[#allocation2 + $0xf]]
        %v230 = vstv %s229
        %v231 = vmul.f32 %v195, %v230
        %v232 = vadd.f32 %v228, %v231
        %s233 = sld [smem:[#allocation2 + $0x14]]
        %v234 = vstv %s233
        %v235 = vmul.f32 %v205, %v234
        %v236 = vadd.f32 %v232, %v235
        %s237 = sld [smem:[#allocation2 + $0x19]]
        %v238 = vstv %s237
        %v239 = vmul.f32 %v215, %v238
        %v240 = vadd.f32 %v236, %v239
        %s241 = sld [smem:[#allocation2 + $0x1e]]
        %v242 = vstv %s241
        %v243 = vmul.f32 %v225, %v242
        %v244 = vadd.f32 %v240, %v243
        %s245 = sld [smem:[#allocation2 + $0x23]]
        %v246 = vstv %s245
        %v247 = vadd.f32 %v244, %v246
        %v248 = vmul.f32 %v247, 0.5
        %v249 = vtanh.pop %v248
        %v250 = vadd.f32 %v249, 1.0
        %v251 = vmul.f32 %v250, 0.5
        %s252 = sld [smem:[#allocation2 + $0xb]]
        %v253 = vstv %s252
        %v254 = vmul.f32 %v185, %v253
        %s255 = sld [smem:[#allocation2 + $0x10]]
        %v256 = vstv %s255
        %v257 = vmul.f32 %v195, %v256
        %v258 = vadd.f32 %v254, %v257
        %s259 = sld [smem:[#allocation2 + $0x15]]
        %v260 = vstv %s259
        %v261 = vmul.f32 %v205, %v260
        %v262 = vadd.f32 %v258, %v261
        %s263 = sld [smem:[#allocation2 + $0x1a]]
        %v264 = vstv %s263
        %v265 = vmul.f32 %v215, %v264
        %v266 = vadd.f32 %v262, %v265
        %s267 = sld [smem:[#allocation2 + $0x1f]]
        %v268 = vstv %s267
        %v269 = vmul.f32 %v225, %v268
        %v270 = vadd.f32 %v266, %v269
        %s271 = sld [smem:[#allocation2 + $0x24]]
        %v272 = vstv %s271
        %v273 = vadd.f32 %v270, %v272
        %v274 = vmul.f32 %v273, 0.5
        %v275 = vtanh.pop %v274
        %v276 = vadd.f32 %v275, 1.0
        %v277 = vmul.f32 %v276, 0.5
        %s278 = sld [smem:[#allocation2 + $0xc]]
        %v279 = vstv %s278
        %v280 = vmul.f32 %v185, %v279
        %s281 = sld [smem:[#allocation2 + $0x11]]
        %v282 = vstv %s281
        %v283 = vmul.f32 %v195, %v282
        %v284 = vadd.f32 %v280, %v283
        %s285 = sld [smem:[#allocation2 + $0x16]]
        %v286 = vstv %s285
        %v287 = vmul.f32 %v205, %v286
        %v288 = vadd.f32 %v284, %v287
        %s289 = sld [smem:[#allocation2 + $0x1b]]
        %v290 = vstv %s289
        %v291 = vmul.f32 %v215, %v290
        %v292 = vadd.f32 %v288, %v291
        %s293 = sld [smem:[#allocation2 + $0x20]]
        %v294 = vstv %s293
        %v295 = vmul.f32 %v225, %v294
        %v296 = vadd.f32 %v292, %v295
        %s297 = sld [smem:[#allocation2 + $0x25]]
        %v298 = vstv %s297
        %v299 = vadd.f32 %v296, %v298
        %v300 = vmul.f32 %v299, 0.5
        %v301 = vtanh.pop %v300
        %v302 = vadd.f32 %v301, 1.0
        %v303 = vmul.f32 %v302, 0.5
        %s304 = sld [smem:[#allocation2 + $0xd]]
        %v305 = vstv %s304
        %v306 = vmul.f32 %v185, %v305
        %s307 = sld [smem:[#allocation2 + $0x12]]
        %v308 = vstv %s307
        %v309 = vmul.f32 %v195, %v308
        %v310 = vadd.f32 %v306, %v309
        %s311 = sld [smem:[#allocation2 + $0x17]]
        %v312 = vstv %s311
        %v313 = vmul.f32 %v205, %v312
        %v314 = vadd.f32 %v310, %v313
        %s315 = sld [smem:[#allocation2 + $0x1c]]
        %v316 = vstv %s315
        %v317 = vmul.f32 %v215, %v316
        %v318 = vadd.f32 %v314, %v317
        %s319 = sld [smem:[#allocation2 + $0x21]]
        %v320 = vstv %s319
        %v321 = vmul.f32 %v225, %v320
        %v322 = vadd.f32 %v318, %v321
        %s323 = sld [smem:[#allocation2 + $0x26]]
        %v324 = vstv %s323
        %v325 = vadd.f32 %v322, %v324
        %v326 = vmul.f32 %v325, 0.5
        %v327 = vtanh.pop %v326
        %v328 = vadd.f32 %v327, 1.0
        %v329 = vmul.f32 %v328, 0.5
        %s330 = sld [smem:[#allocation2 + $0xe]]
        %v331 = vstv %s330
        %v332 = vmul.f32 %v185, %v331
        %s333 = sld [smem:[#allocation2 + $0x13]]
        %v334 = vstv %s333
        %v335 = vmul.f32 %v195, %v334
        %v336 = vadd.f32 %v332, %v335
        %s337 = sld [smem:[#allocation2 + $0x18]]
        %v338 = vstv %s337
        %v339 = vmul.f32 %v205, %v338
        %v340 = vadd.f32 %v336, %v339
        %s341 = sld [smem:[#allocation2 + $0x1d]]
        %v342 = vstv %s341
        %v343 = vmul.f32 %v215, %v342
        %v344 = vadd.f32 %v340, %v343
        %s345 = sld [smem:[#allocation2 + $0x22]]
        %v346 = vstv %s345
        %v347 = vmul.f32 %v225, %v346
        %v348 = vadd.f32 %v344, %v347
        %s349 = sld [smem:[#allocation2 + $0x27]]
        %v350 = vstv %s349
        %v351 = vadd.f32 %v348, %v350
        %v352 = vmul.f32 %v351, 0.5
        %v353 = vtanh.pop %v352
        %v354 = vadd.f32 %v353, 1.0
        %v355 = vmul.f32 %v354, 0.5
        %s356 = sld [smem:[#allocation2 + $0x28]]
        %v357 = vstv %s356
        %v358 = vmul.f32 %v251, %v357
        %s359 = sld [smem:[#allocation2 + $0x29]]
        %v360 = vstv %s359
        %v361 = vmul.f32 %v277, %v360
        %v362 = vadd.f32 %v358, %v361
        %s363 = sld [smem:[#allocation2 + $0x2a]]
        %v364 = vstv %s363
        %v365 = vmul.f32 %v303, %v364
        %v366 = vadd.f32 %v362, %v365
        %s367 = sld [smem:[#allocation2 + $0x2b]]
        %v368 = vstv %s367
        %v369 = vmul.f32 %v329, %v368
        %v370 = vadd.f32 %v366, %v369
        %s371 = sld [smem:[#allocation2 + $0x2c]]
        %v372 = vstv %s371
        %v373 = vmul.f32 %v355, %v372
        %v374 = vadd.f32 %v370, %v373
        %s375 = sld [smem:[#allocation2 + $0x2d]]
        %v376 = vstv %s375
        %v377 = vadd.f32 %v374, %v376
        %378 = vst [vmem:[%s174] sm:$0xff] %v377
        %s379 = sand.u32 %s75, 1
        %s380 = scalar_lea.sflag [#allocation4], %s379
        %s381 = sand.u32 %s75, 1
        %s382 = smul.addr %s381, 8
        %s383 = scalar_lea.vmem [#allocation7], %s382
        // Predicated region
        $region37: #{tpu_custom_call.1} parent=27 // pred_check
          %p384 = pneg %p85
        $region38: #{tpu_custom_call.1} parent=27 // pred_check_branch
          %386 = sbr.rel (%p384) target = $region40
        $region39: #{tpu_custom_call.1} parent=27 // pred_region
          %388 = vsyncadd %s380, 0
          %s389 = smul.addr %s20, 8
          %s390 = scalar_lea.hbm %s2, %s389
          %s392 = sshll.u32 %s383, 4
          %s393 = int_to_ptr.vmem [resolvable:$true] %s392
          %s394 = sshll.u32 %s390, 4
          %s395 = int_to_ptr.hbm [resolvable:$true] %s394
          %397 = dma.vmem_to_hbm [thread:$0]  %s393, 128, %s395, %s380
        $region40: #{tpu_custom_call.1} parent=27 // pred_fallthru
          _
      $region28: #{tpu_custom_call.1} parent=5 // pred_fallthru
        _
      %p398 = scmp.le.s32.totalorder 2, %s15
      // Predicated region
      $region41: #{tpu_custom_call.1} parent=5 // pred_check
        %p399 = pneg %p398
      $region42: #{tpu_custom_call.1} parent=5 // pred_check_branch
        %401 = sbr.rel (%p399) target = $region44
      $region43: #{tpu_custom_call.1} parent=5 // pred_region
        %s402 = ssub.s32 %s15, 2
        // Predicated region
        $region45: #{tpu_custom_call.1} parent=43 // pred_check
          %p403 = pneg %p91
        $region46: #{tpu_custom_call.1} parent=43 // pred_check_branch
          %405 = sbr.rel (%p403) target = $region48
        $region47: #{tpu_custom_call.1} parent=43 // pred_region
          %s406 = sand.u32 %s76, 1
          %s407 = scalar_lea.sflag [#allocation4], %s406
          %s408 = sand.u32 %s76, 1
          %s409 = smul.addr %s408, 8
          %s410 = scalar_lea.vmem [#allocation7], %s409
          %412 = dma.done %s407, 128
        $region48: #{tpu_custom_call.1} parent=43 // pred_fallthru
          _
      $region44: #{tpu_custom_call.1} parent=5 // pred_fallthru
        _
    $region6: #{tpu_custom_call.1} parent=1 // loop_footer
      %s19 = sadd.s32 1, %s15
    $region7: #{tpu_custom_call.1} parent=1 // loop_footer_branch
      %14 = sbr.rel target = $region3
    $region8: #{tpu_custom_call.1} parent=1 // loop_exit
      _
    %413 = vsyncpa [#allocation3], 1
    %s414 = scalar_lea.sflag [#allocation3], 1
    %415 = vsyncpa %s414, 1
    %416 = vsyncpa [#allocation4], 1
    %s417 = scalar_lea.sflag [#allocation4], 1
    %418 = vsyncpa %s417, 1
    %419 = vsyncpa [#allocation5], 1
    %s420 = scalar_lea.sflag [#allocation5], 1
    %421 = vsyncpa %s420, 1

</llo_original>
